<compile_context>
chip_gen: v7x
topology: tpu7x:2x2x1
jax: 0.10.0
libtpu: 0.0.40
codegen_flags: <defaults>
</compile_context>

<pallas_src>
import functools

import jax
import jax.numpy as jnp
from jax.experimental import pallas as pl
from jax.experimental.pallas import tpu as pltpu

_NEG = jnp.float32(-1e30)   # "minus infinity" that stays finite under subtraction
_EPS = 1e-8


# --------------------------- guide normalizers -------------------------------
def _norm_fn(x, method, valid=None, true_v=None):
    """Normalization over the last axis; mirrors the torch normalizers.

    `valid` (broadcastable bool) marks real (non lane-padded) entries; padded
    entries are excluded from reductions. l1/l2/sigmoid intentionally have no
    eps guard to match the original torch module exactly.
    """
    if method == "softmax":
        xm = x if valid is None else jnp.where(valid, x, _NEG)
        e = jnp.exp(xm - jnp.max(xm, axis=-1, keepdims=True))
        return e / jnp.sum(e, axis=-1, keepdims=True)
    if method == "sigmoid":
        return 1.0 / (1.0 + jnp.exp(-x))
    if method == "l1":
        xs = x if valid is None else jnp.where(valid, x, 0.0)
        return x / jnp.sum(jnp.abs(xs), axis=-1, keepdims=True)
    if method == "l2":
        xs = x if valid is None else jnp.where(valid, x, 0.0)
        return x / jnp.sqrt(jnp.sum(xs * xs, axis=-1, keepdims=True))
    if method == "zscore":
        n = x.shape[-1] if valid is None else true_v
        xs = x if valid is None else jnp.where(valid, x, 0.0)
        mu = jnp.sum(xs, axis=-1, keepdims=True) / n
        d2 = (x - mu) ** 2
        if valid is not None:
            d2 = jnp.where(valid, d2, 0.0)
        std = jnp.sqrt(jnp.sum(d2, axis=-1, keepdims=True) / (n - 1))  # unbiased (torch.std)
        return (x - mu) / (std + _EPS)
    raise NotImplementedError(method)


# ------------------------------ Pallas kernel ---------------------------------
def _map_kl_kernel(idf_ref, dense_ref, logits_ref, teacher_ref, kl_ref, *,
                   map_method, norm_method, true_v):
    """Processes a tile of Bt batch rows.

    idf_ref:     (1, Vp)       pre-normalized idf vector (f32, shared)
    dense_ref:   (Bt, L, D)    student dense token matrices (native dtype)
    logits_ref:  (Bt, L, Vp)   teacher per-token sparse logits (native dtype)
    teacher_ref: (Bt, Vp)      teacher pooled sparse embeddings
    kl_ref:      (Bt, 1)       per-row KL sums (f32)
    """
    d = dense_ref[...]          # (Bt, L, D)
    s = logits_ref[...]         # (Bt, L, Vp)
    vp = s.shape[-1]

    valid = None
    if vp != true_v:
        valid = jax.lax.broadcasted_iota(jnp.int32, (1, vp), 1) < true_v

    # ---- dense -> sparse map: contract over tokens L, reduce over dense dim D ----
    if map_method == "max":
        # bf16 straight into the MXU, f32 accumulation.
        m = jnp.einsum("bld,blv->bdv", d, s, preferred_element_type=jnp.float32)
        row = jnp.max(m, axis=1)                                   # (Bt, Vp)
    elif map_method in ("sum", "mean"):
        # Fold the D-reduction in first: sum_d dense -> (Bt, L); avoids the (Bt,D,Vp)
        # intermediate and the sublane reduce.
        dsum = jnp.sum(d.astype(jnp.float32), axis=-1)             # (Bt, L)
        row = jnp.sum(dsum[:, :, None] * s.astype(jnp.float32), axis=1)   # (Bt, Vp)
        if map_method == "mean":
            row = row / d.shape[-1]
    else:
        raise NotImplementedError(map_method)

    if valid is not None:
        row = jnp.where(valid, row, _NEG)

    # ---- log_softmax of the student map row over V ----
    z = row - jnp.max(row, axis=-1, keepdims=True)
    log_p = z - jnp.log(jnp.sum(jnp.exp(z), axis=-1, keepdims=True))

    # ---- semantic-idf guide: norm(idf) (precomputed) * norm(teacher embedding) ----
    idf_n = idf_ref[...]                                           # (1, Vp)
    tea_n = _norm_fn(teacher_ref[...].astype(jnp.float32), norm_method,
                     valid=valid, true_v=true_v)                   # (Bt, Vp)
    target_raw = idf_n * tea_n
    if valid is not None:
        target_raw = jnp.where(valid, target_raw, _NEG)

    # ---- target softmax in log space (no separate log(target), no 0*-inf NaN) ----
    t = target_raw - jnp.max(target_raw, axis=-1, keepdims=True)
    t_lse = jnp.log(jnp.sum(jnp.exp(t), axis=-1, keepdims=True))
    t_log = t - t_lse
    target = jnp.exp(t_log)

    # ---- per-row KL, reduced over V in-kernel (tiny writeback) ----
    kl_ref[...] = jnp.sum(target * (t_log - log_p), axis=-1, keepdims=True)


def _pick_bt(btot, l, d, vp, dense_bytes, logit_bytes, map_method):
    """Largest divisor of btot whose working set fits a conservative VMEM budget."""
    budget = 32 * 1024 * 1024
    best = 1
    for bt in range(1, btot + 1):
        if btot % bt:
            continue
        need = 2 * bt * (l * vp * logit_bytes + l * d * dense_bytes + vp * 4)  # dbl-buffered inputs
        need += 4 * bt * vp * 4                                                # f32 temporaries
        if map_method == "max":
            need += bt * d * vp * 4                                            # (Bt, D, Vp) matmul result
        if need <= budget:
            best = bt
    # TODO(synk): for production V (tens of thousands) with bt==1 still over budget,
    #             tile V with an online log-softmax / add an L reduction grid axis.
    return best


def _per_row_kl(dense, logits, teacher, idf_n, *, map_method, norm_method, true_v):
    btot, l, d = dense.shape
    vp = logits.shape[-1]
    bt = _pick_bt(btot, l, d, vp, dense.dtype.itemsize, logits.dtype.itemsize, map_method)

    kernel = functools.partial(_map_kl_kernel, map_method=map_method,
                               norm_method=norm_method, true_v=true_v)

    return pl.pallas_call(
        kernel,
        out_shape=jax.ShapeDtypeStruct((btot, 1), jnp.float32),
        grid_spec=pltpu.PrefetchScalarGridSpec(
            num_scalar_prefetch=0,
            grid=(btot // bt,),
            in_specs=[
                pl.BlockSpec((1, vp), lambda b: (0, 0)),        # normalized idf (shared)
                pl.BlockSpec((bt, l, d), lambda b: (b, 0, 0)),  # dense matrices
                pl.BlockSpec((bt, l, vp), lambda b: (b, 0, 0)), # teacher logits
                pl.BlockSpec((bt, vp), lambda b: (b, 0)),       # teacher embeddings
            ],
            out_specs=pl.BlockSpec((bt, 1), lambda b: (b, 0)),  # per-row KL
        ),
        compiler_params=pltpu.CompilerParams(
            dimension_semantics=("parallel",),
            vmem_limit_bytes=64 * 1024 * 1024),
    )(idf_n, dense, logits, teacher)


# ------------------------------ module forward --------------------------------
def d2s_semantic_idf_without_gpl_forward(pos_pas_emb, neg_pas_emb,
                                         teacher_pos_pas_emb, teacher_neg_pas_emb,
                                         idf, *, map_method="max",
                                         norm_method="softmax"):
    # Fuse the pos and neg passes into a single pallas_call over the stacked batch.
    # (For very large inputs one could pass pre-concatenated tensors to skip this copy.)
    dense = jnp.concatenate([pos_pas_emb["encoded_matrix"],
                             neg_pas_emb["encoded_matrix"]], axis=0)
    logits = jnp.concatenate([teacher_pos_pas_emb["encoded_logits"],
                              teacher_neg_pas_emb["encoded_logits"]], axis=0)
    teacher = jnp.concatenate([teacher_pos_pas_emb["encoded_embeddings"],
                               teacher_neg_pas_emb["encoded_embeddings"]], axis=0)

    b_side = pos_pas_emb["encoded_matrix"].shape[0]
    v = logits.shape[-1]
    vp = ((v + 127) // 128) * 128

    # norm(idf) is a constant per call: compute once in JAX, don't redo it per grid step.
    idf_n = _norm_fn(idf.astype(jnp.float32), norm_method).reshape(1, v)

    if vp != v:  # lane-dense padding; padded lanes are masked out inside the kernel
        pad = vp - v
        idf_n = jnp.pad(idf_n, ((0, 0), (0, pad)))
        logits = jnp.pad(logits, ((0, 0), (0, 0), (0, pad)))
        teacher = jnp.pad(teacher, ((0, 0), (0, pad)))

    kl_rows = _per_row_kl(dense, logits, teacher, idf_n,
                          map_method=map_method, norm_method=norm_method, true_v=v)

    # 'batchmean' per side, then pos + neg  ==  sum over all rows / per-side batch.
    map_loss = jnp.sum(kl_rows) / b_side
    return {"map_loss": map_loss, "loss": map_loss}


# ------------------------------ pure-JAX reference -----------------------------
def _reference_forward(pos_pas_emb, neg_pas_emb, teacher_pos, teacher_neg, idf,
                       map_method="max", norm_method="softmax"):
    def side(dense, logits, teacher):
        m = jnp.einsum("bld,blv->bdv",
                       dense.astype(jnp.float32), logits.astype(jnp.float32))
        if map_method == "max":
            mp = m.max(axis=1)
        elif map_method == "mean":
            mp = m.mean(axis=1)
        else:
            mp = m.sum(axis=1)
        log_p = jax.nn.log_softmax(mp, axis=-1)
        guide = (_norm_fn(idf.astype(jnp.float32), norm_method)[None, :]
                 * _norm_fn(teacher.astype(jnp.float32), norm_method))
        target = jax.nn.softmax(guide, axis=-1)
        return jnp.sum(target * (jnp.log(target) - log_p)) / dense.shape[0]

    return (side(pos_pas_emb["encoded_matrix"], teacher_pos["encoded_logits"],
                 teacher_pos["encoded_embeddings"])
            + side(neg_pas_emb["encoded_matrix"], teacher_neg["encoded_logits"],
                   teacher_neg["encoded_embeddings"]))


if __name__ == "__main__":
    B, L, D, V = 2, 8, 32, 128   # batch, seq_len, dense_dim, sparse vocab

    key = jax.random.PRNGKey(0)
    ks = jax.random.split(key, 8)

    # Deterministic synthetic "idf" (the torch module normally loads it from json).
    idf = jax.random.uniform(ks[0], (V,), jnp.float32, minval=0.5, maxval=8.0)

    # Big tensors in bf16 (native model dtype) — no f32 pre-cast anywhere in the wrapper.
    pos_pas_emb = {"encoded_matrix": jax.random.normal(ks[1], (B, L, D), jnp.bfloat16)}
    neg_pas_emb = {"encoded_matrix": jax.random.normal(ks[2], (B, L, D), jnp.bfloat16)}
    teacher_pos_pas_emb = {
        "encoded_logits": jax.random.normal(ks[3], (B, L, V), jnp.bfloat16),
        "encoded_embeddings": jax.random.normal(ks[4], (B, V), jnp.float32),
    }
    teacher_neg_pas_emb = {
        "encoded_logits": jax.random.normal(ks[5], (B, L, V), jnp.bfloat16),
        "encoded_embeddings": jax.random.normal(ks[6], (B, V), jnp.float32),
    }

    losses = d2s_semantic_idf_without_gpl_forward(
        pos_pas_emb, neg_pas_emb, teacher_pos_pas_emb, teacher_neg_pas_emb, idf,
        map_method="max", norm_method="softmax")
    jax.block_until_ready(losses["loss"])

    ref = _reference_forward(pos_pas_emb, neg_pas_emb,
                             teacher_pos_pas_emb, teacher_neg_pas_emb, idf,
                             map_method="max", norm_method="softmax")
    assert jnp.allclose(losses["loss"], ref, atol=2e-3, rtol=2e-3), (losses["loss"], ref)
    assert jnp.allclose(losses["map_loss"], losses["loss"])

    print("KERNEL_OK")
</pallas_src>

<mosaic_0001>
module attributes {stable_mosaic.version = 11 : i64} {
  func.func @_map_kl_kernel(%arg0: i32, %arg1: memref<1x128xf32, #tpu.memory_space<vmem>>, %arg2: memref<4x8x32xbf16, #tpu.memory_space<vmem>>, %arg3: memref<4x8x128xbf16, #tpu.memory_space<vmem>>, %arg4: memref<4x128xf32, #tpu.memory_space<vmem>>, %arg5: memref<4x1xf32, #tpu.memory_space<vmem>>) attributes {dimension_semantics = [#tpu.dimension_semantics<parallel>], iteration_bounds = array<i64: 1>, scalar_prefetch = 0 : i64, scratch_operands = 0 : i64, tpu.core_type = #tpu.core_type<tc>, window_params = [{pipeline_mode = #tpu.pipeline_mode<synchronous>, transform_indices = @transform_0, window_bounds = array<i64: 1, 128>}, {transform_indices = @transform_1, window_bounds = array<i64: 4, 8, 32>}, {transform_indices = @transform_2, window_bounds = array<i64: 4, 8, 128>}, {transform_indices = @transform_3, window_bounds = array<i64: 4, 128>}, {transform_indices = @transform_4, window_bounds = array<i64: 4, 1>}]} {
    %c0 = arith.constant 0 : index
    %c0_0 = arith.constant 0 : index
    %c0_1 = arith.constant 0 : index
    %0 = vector.load %arg2[%c0, %c0_0, %c0_1] : memref<4x8x32xbf16, #tpu.memory_space<vmem>>, vector<4x8x32xbf16>
    %c0_2 = arith.constant 0 : index
    %c0_3 = arith.constant 0 : index
    %c0_4 = arith.constant 0 : index
    %1 = vector.load %arg3[%c0_2, %c0_3, %c0_4] : memref<4x8x128xbf16, #tpu.memory_space<vmem>>, vector<4x8x128xbf16>
    "tpu.trace_start"() <{level = 10 : i32, message = "bld,blv->bdv"}> : () -> ()
    %cst = arith.constant dense<0.000000e+00> : vector<4x32x128xf32>
    %2 = tpu.matmul %0, %1, %cst {dimension_numbers = #tpu.dot_dimension_numbers<[1], [1], [2], [2], [0, 0, 0, 2, 1, 2], [0], [0]>} : vector<4x8x32xbf16>, vector<4x8x128xbf16>, vector<4x32x128xf32> -> vector<4x32x128xf32>
    "tpu.trace_stop"() : () -> ()
    %cst_5 = arith.constant dense<0xFF800000> : vector<4x128xf32>
    %3 = vector.multi_reduction <maximumf>, %2, %cst_5 [1] : vector<4x32x128xf32> to vector<4x128xf32>
    %cst_6 = arith.constant dense<0xFF800000> : vector<4xf32>
    %4 = vector.multi_reduction <maximumf>, %3, %cst_6 [1] : vector<4x128xf32> to vector<4xf32>
    %5 = vector.shape_cast %4 : vector<4xf32> to vector<4x1xf32>
    %6 = vector.broadcast %5 : vector<4x1xf32> to vector<4x128xf32>
    %7 = arith.subf %3, %6 : vector<4x128xf32>
    %8 = math.exp %7 : vector<4x128xf32>
    %cst_7 = arith.constant dense<0.000000e+00> : vector<4xf32>
    %9 = vector.multi_reduction <add>, %8, %cst_7 [1] : vector<4x128xf32> to vector<4xf32>
    %10 = vector.shape_cast %9 : vector<4xf32> to vector<4x1xf32>
    %11 = math.log %10 : vector<4x1xf32>
    %12 = vector.broadcast %11 : vector<4x1xf32> to vector<4x128xf32>
    %13 = arith.subf %7, %12 : vector<4x128xf32>
    %c0_8 = arith.constant 0 : index
    %c0_9 = arith.constant 0 : index
    %14 = vector.load %arg1[%c0_8, %c0_9] : memref<1x128xf32, #tpu.memory_space<vmem>>, vector<1x128xf32>
    %c0_10 = arith.constant 0 : index
    %c0_11 = arith.constant 0 : index
    %15 = vector.load %arg4[%c0_10, %c0_11] : memref<4x128xf32, #tpu.memory_space<vmem>>, vector<4x128xf32>
    %cst_12 = arith.constant dense<0xFF800000> : vector<4xf32>
    %16 = vector.multi_reduction <maximumf>, %15, %cst_12 [1] : vector<4x128xf32> to vector<4xf32>
    %17 = vector.shape_cast %16 : vector<4xf32> to vector<4x1xf32>
    %18 = vector.broadcast %17 : vector<4x1xf32> to vector<4x128xf32>
    %19 = arith.subf %15, %18 : vector<4x128xf32>
    %20 = math.exp %19 : vector<4x128xf32>
    %cst_13 = arith.constant dense<0.000000e+00> : vector<4xf32>
    %21 = vector.multi_reduction <add>, %20, %cst_13 [1] : vector<4x128xf32> to vector<4xf32>
    %22 = vector.shape_cast %21 : vector<4xf32> to vector<4x1xf32>
    %23 = vector.broadcast %22 : vector<4x1xf32> to vector<4x128xf32>
    %24 = arith.divf %20, %23 : vector<4x128xf32>
    %25 = vector.broadcast %14 : vector<1x128xf32> to vector<4x128xf32>
    %26 = arith.mulf %25, %24 : vector<4x128xf32>
    %cst_14 = arith.constant dense<0xFF800000> : vector<4xf32>
    %27 = vector.multi_reduction <maximumf>, %26, %cst_14 [1] : vector<4x128xf32> to vector<4xf32>
    %28 = vector.shape_cast %27 : vector<4xf32> to vector<4x1xf32>
    %29 = vector.broadcast %28 : vector<4x1xf32> to vector<4x128xf32>
    %30 = arith.subf %26, %29 : vector<4x128xf32>
    %31 = math.exp %30 : vector<4x128xf32>
    %cst_15 = arith.constant dense<0.000000e+00> : vector<4xf32>
    %32 = vector.multi_reduction <add>, %31, %cst_15 [1] : vector<4x128xf32> to vector<4xf32>
    %33 = vector.shape_cast %32 : vector<4xf32> to vector<4x1xf32>
    %34 = math.log %33 : vector<4x1xf32>
    %35 = vector.broadcast %34 : vector<4x1xf32> to vector<4x128xf32>
    %36 = arith.subf %30, %35 : vector<4x128xf32>
    %37 = math.exp %36 : vector<4x128xf32>
    %38 = arith.subf %36, %13 : vector<4x128xf32>
    %39 = arith.mulf %37, %38 : vector<4x128xf32>
    %cst_16 = arith.constant dense<0.000000e+00> : vector<4xf32>
    %40 = vector.multi_reduction <add>, %39, %cst_16 [1] : vector<4x128xf32> to vector<4xf32>
    %41 = vector.shape_cast %40 : vector<4xf32> to vector<4x1xf32>
    %c0_17 = arith.constant 0 : index
    %c0_18 = arith.constant 0 : index
    %42 = vector.load %arg5[%c0_17, %c0_18] : memref<4x1xf32, #tpu.memory_space<vmem>>, vector<4x1xf32>
    tpu.vector_store %arg5[%c0_17, %c0_18], %41 {strides = array<i32>} : memref<4x1xf32, #tpu.memory_space<vmem>>, vector<4x1xf32>,
    return
  }
  func.func @transform_0(%arg0: i32) -> (i32, i32) {
    %c0_i32 = arith.constant 0 : i32
    %c0_i32_0 = arith.constant 0 : i32
    %c0_i32_1 = arith.constant 0 : i32
    return %c0_i32, %c0_i32_0 : i32, i32
  }
  func.func @transform_1(%arg0: i32) -> (i32, i32, i32) {
    %c0_i32 = arith.constant 0 : i32
    %c0_i32_0 = arith.constant 0 : i32
    %c0_i32_1 = arith.constant 0 : i32
    return %arg0, %c0_i32, %c0_i32_0 : i32, i32, i32
  }
  func.func @transform_2(%arg0: i32) -> (i32, i32, i32) {
    %c0_i32 = arith.constant 0 : i32
    %c0_i32_0 = arith.constant 0 : i32
    %c0_i32_1 = arith.constant 0 : i32
    return %arg0, %c0_i32, %c0_i32_0 : i32, i32, i32
  }
  func.func @transform_3(%arg0: i32) -> (i32, i32) {
    %c0_i32 = arith.constant 0 : i32
    %c0_i32_0 = arith.constant 0 : i32
    return %arg0, %c0_i32 : i32, i32
  }
  func.func @transform_4(%arg0: i32) -> (i32, i32) {
    %c0_i32 = arith.constant 0 : i32
    %c0_i32_0 = arith.constant 0 : i32
    return %arg0, %c0_i32 : i32, i32
  }
}

</mosaic_0001>

<llo_original>
// kernel: tpu_custom_call.1
$region0: #{tpu_custom_call.1}
  #allocation0 [shape = 'u32[]', space=smem, size = 0x4, offset = 0x4, fixed_abs, tag = 'smem constant byte address 0x4 - core index']
  #allocation1 [shape = 'u32[144,128]{1,0:T(1,128)}', space=vmem, size = 0x12000, scoped, tag = 'internal scratch']
  %s0 = inlined_call_operand.hbm [shape: f32[1,128], index: 0, kind: input, shape index: {}]
  %s1 = inlined_call_operand.hbm [shape: bf16[4,8,32], index: 1, kind: input, shape index: {}]
  %s2 = inlined_call_operand.hbm [shape: bf16[4,8,128], index: 2, kind: input, shape index: {}]
  %s3 = inlined_call_operand.hbm [shape: f32[4,128], index: 3, kind: input, shape index: {}]
  %s4 = inlined_call_operand.hbm [shape: f32[4,1], index: 4, kind: output, shape index: {}]
  %s5 = sld [smem:[#allocation0]]
  $region42: #{tpu_custom_call.1} parent=0
    _
  %s7 = ssub.s32 1, %s5
  %s8 = scalar_select 0, %s7, %s5
  $region1: #{tpu_custom_call.1} parent=0
    #allocation2 [shape = 'u8[512]{0}', space=vmem, size = 0x400, scoped, tag = 'input window, operand 0, single buffered']
    #allocation3 [shape = 's32[1]{0}', space=sflag, size = 0x4, scoped, tag = 'scoped memory for tpu_custom_call.1']
    #allocation4 [shape = 's32[1]{0}', space=sflag, size = 0x4, scoped, tag = 'scoped memory for tpu_custom_call.1']
    #allocation5 [shape = 'u8[8192]{0}', space=vmem, size = 0x2000, scoped, tag = 'input window, operand 1, single buffered']
    #allocation6 [shape = 's32[1]{0}', space=sflag, size = 0x4, scoped, tag = 'scoped memory for tpu_custom_call.1']
    #allocation7 [shape = 'u8[8192]{0}', space=vmem, size = 0x2000, scoped, tag = 'input window, operand 2, single buffered']
    #allocation8 [shape = 'u8[2048]{0}', space=vmem, size = 0x800, scoped, tag = 'input window, operand 3, single buffered']
    #allocation9 [shape = 's32[1]{0}', space=sflag, size = 0x4, scoped, tag = 'scoped memory for tpu_custom_call.1']
    #allocation10 [shape = 'u8[2048]{0}', space=vmem, size = 0x800, scoped, tag = 'output window, operand 0, single buffered']
    %9 = vsyncpa [#allocation3], 0
    %10 = vsyncpa [#allocation6], 0
    %11 = vsyncpa [#allocation9], 0
    %12 = vsyncpa [#allocation4], 0
    // Predicated region
    $region2: #{tpu_custom_call.1} parent=1 // pred_check
      _
    $region3: #{tpu_custom_call.1} parent=1 // pred_check_branch
      %14 = sbr.rel (0) target = $region5
    $region4: #{tpu_custom_call.1} parent=1 // pred_region
      %s16 = ssub.s32 16, 16
      %17 = vsyncadd [#allocation3], %s16
      %s19 = sshll.u32 [#allocation2], 4
      %s20 = int_to_ptr.vmem [resolvable:$true] %s19
      %22 = dma.hbm_to_vmem [thread:$0]  %s0, 16, %s20, [#allocation3]
    $region5: #{tpu_custom_call.1} parent=1 // pred_fallthru
      _
    // Predicated region
    $region6: #{tpu_custom_call.1} parent=1 // pred_check
      _
    $region7: #{tpu_custom_call.1} parent=1 // pred_check_branch
      %24 = sbr.rel (0) target = $region9
    $region8: #{tpu_custom_call.1} parent=1 // pred_region
      %s26 = ssub.s32 256, 256
      %27 = vsyncadd [#allocation6], %s26
      %s28 = sshll.u32 [#allocation5], 4
      %s29 = int_to_ptr.vmem [resolvable:$true] %s28
      %34 = dma.hbm_to_vmem [thread:$0]  %s1, 256, %s29, [#allocation6], 64, 64, 4
    $region9: #{tpu_custom_call.1} parent=1 // pred_fallthru
      _
    // Predicated region
    $region10: #{tpu_custom_call.1} parent=1 // pred_check
      _
    $region11: #{tpu_custom_call.1} parent=1 // pred_check_branch
      %36 = sbr.rel (0) target = $region13
    $region12: #{tpu_custom_call.1} parent=1 // pred_region
      %s38 = ssub.s32 256, 256
      %39 = vsyncadd [#allocation6], %s38
      %s40 = sshll.u32 [#allocation7], 4
      %s41 = int_to_ptr.vmem [resolvable:$true] %s40
      %46 = dma.hbm_to_vmem [thread:$0]  %s2, 256, %s41, [#allocation6], 64, 64, 4
    $region13: #{tpu_custom_call.1} parent=1 // pred_fallthru
      _
    // Predicated region
    $region14: #{tpu_custom_call.1} parent=1 // pred_check
      _
    $region15: #{tpu_custom_call.1} parent=1 // pred_check_branch
      %48 = sbr.rel (0) target = $region17
    $region16: #{tpu_custom_call.1} parent=1 // pred_region
      %s50 = ssub.s32 64, 64
      %51 = vsyncadd [#allocation9], %s50
      %s53 = sshll.u32 [#allocation8], 4
      %s54 = int_to_ptr.vmem [resolvable:$true] %s53
      %56 = dma.hbm_to_vmem [thread:$0]  %s3, 64, %s54, [#allocation9]
    $region17: #{tpu_custom_call.1} parent=1 // pred_fallthru
      _
    // Predicated region
    $region18: #{tpu_custom_call.1} parent=1 // pred_check
      _
    $region19: #{tpu_custom_call.1} parent=1 // pred_check_branch
      %58 = sbr.rel (0) target = $region21
    $region20: #{tpu_custom_call.1} parent=1 // pred_region
      %59 = dma.done [#allocation3], 16
    $region21: #{tpu_custom_call.1} parent=1 // pred_fallthru
      _
    // Predicated region
    $region22: #{tpu_custom_call.1} parent=1 // pred_check
      _
    $region23: #{tpu_custom_call.1} parent=1 // pred_check_branch
      %61 = sbr.rel (0) target = $region25
    $region24: #{tpu_custom_call.1} parent=1 // pred_region
      %62 = dma.done [#allocation6], 256
    $region25: #{tpu_custom_call.1} parent=1 // pred_fallthru
      _
    // Predicated region
    $region26: #{tpu_custom_call.1} parent=1 // pred_check
      _
    $region27: #{tpu_custom_call.1} parent=1 // pred_check_branch
      %64 = sbr.rel (0) target = $region29
    $region28: #{tpu_custom_call.1} parent=1 // pred_region
      %65 = dma.done [#allocation6], 256
    $region29: #{tpu_custom_call.1} parent=1 // pred_fallthru
      _
    // Predicated region
    $region30: #{tpu_custom_call.1} parent=1 // pred_check
      _
    $region31: #{tpu_custom_call.1} parent=1 // pred_check_branch
      %67 = sbr.rel (0) target = $region33
    $region32: #{tpu_custom_call.1} parent=1 // pred_region
      %68 = dma.done [#allocation9], 64
    $region33: #{tpu_custom_call.1} parent=1 // pred_fallthru
      _
    %v70 = vld [vmem:[#allocation5] sm:$0xf]
    %v71 = vld [vmem:[#allocation5 + $0x4] sm:$0xf]
    %v72 = vld [vmem:[#allocation5 + $0x8] sm:$0xf]
    %v73 = vld [vmem:[#allocation5 + $0xc] sm:$0xf]
    %v74 = vld [vmem:[#allocation7] sm:$0xf]
    %v75 = vld [vmem:[#allocation7 + $0x4] sm:$0xf]
    %v76 = vld [vmem:[#allocation7 + $0x8] sm:$0xf]
    %v77 = vld [vmem:[#allocation7 + $0xc] sm:$0xf]
    %78 = vxpose.xlu0.c.b16.start [1/8] %v70, 128
    %79 = vxpose.xlu0.c.b16.cont [2/8] 0, 128
    %80 = vxpose.xlu0.c.b16.cont [3/8] 0, 128
    %81 = vxpose.xlu0.c.b16.cont [4/8] 0, 128
    %82 = vxpose.xlu0.c.b16.cont [5/8] 0, 128
    %83 = vxpose.xlu0.c.b16.cont [6/8] 0, 128
    %84 = vxpose.xlu0.c.b16.cont [7/8] 0, 128
    %85 = vxpose.xlu0.c.b16.end [8/8] 0, 128
    %v86 = vpop.trf.xlu0
    %v87 = vpop.trf.xlu0
    %v88 = vpop.trf.xlu0
    %v89 = vpop.trf.xlu0
    %v90 = vpop.trf.xlu0
    %v91 = vpop.trf.xlu0
    %v92 = vpop.trf.xlu0
    %v93 = vpop.trf.xlu0
    %vm94 = vcmask 64512
    %v96 = vsel %vm94, %v86, 0
    %v99 = vsel %vm94, %v87, 0
    %vm101 = vcmask 1043456
    %v103 = vsel %vm101, %v74, 0
    %105 = vmatprep.subr.bf16.mxu0 0
    %106 = vmatpush1.bf16.msra.mxu0 %v103
    %107 = vmatprep.subr.bf16.mxu0 0
    %108 = vmatpush1.bf16.msra.mxu0 0
    %109 = vmatprep.subr.bf16.mxu0 0
    %110 = vmatpush1.bf16.msra.mxu0 0
    %111 = vmatprep.subr.bf16.mxu0 0
    %112 = vmatpush1.bf16.msra.mxu0 0
    %113 = vmatprep.subr.bf16.mxu0 0
    %114 = vmatpush1.bf16.msra.mxu0 0
    %115 = vmatprep.subr.bf16.mxu0 0
    %116 = vmatpush1.bf16.msra.mxu0 0
    %117 = vmatprep.subr.bf16.mxu0 0
    %118 = vmatpush1.bf16.msra.mxu0 0
    %119 = vmatprep.subr.bf16.mxu0 0
    %120 = vmatpush1.bf16.msra.mxu0 0
    %121 = vmatprep.subr.bf16.mxu0 0
    %122 = vmatpush1.bf16.msra.mxu0 0
    %123 = vmatprep.subr.bf16.mxu0 0
    %124 = vmatpush1.bf16.msra.mxu0 0
    %125 = vmatprep.subr.bf16.mxu0 0
    %126 = vmatpush1.bf16.msra.mxu0 0
    %127 = vmatprep.subr.bf16.mxu0 0
    %128 = vmatpush1.bf16.msra.mxu0 0
    %129 = vmatprep.subr.bf16.mxu0 0
    %130 = vmatpush1.bf16.msra.mxu0 0
    %131 = vmatprep.subr.bf16.mxu0 0
    %132 = vmatpush1.bf16.msra.mxu0 0
    %133 = vmatprep.subr.bf16.mxu0 0
    %134 = vmatpush1.bf16.msra.mxu0 0
    %135 = vmatprep.subr.bf16.mxu0 0
    %136 = vmatpush1.bf16.msra.mxu0 0
    %137 = vmatprep.mubr.bf16.mxu0 0
    %138 = vmatmul.mubr.bf16.gmra.mrb[0].mxu0 %v96
    %v139 = vpop.f32.mrb[0].mxu0
    %v140 = vadd.f32 0.0, %v139
    %v141 = vpop.f32.mrb[0].mxu0
    %v142 = vpop.f32.mrb[0].mxu0
    %v143 = vadd.f32 0.0, %v142
    %v144 = vpop.f32.mrb[0].mxu0
    %145 = vmatprep.mubr.bf16.mxu0 0
    %146 = vmatmul.mubr.bf16.gmra.mrb[0].mxu0 %v99
    %v147 = vpop.f32.mrb[0].mxu0
    %v148 = vadd.f32 0.0, %v147
    %v149 = vpop.f32.mrb[0].mxu0
    %v150 = vpop.f32.mrb[0].mxu0
    %v151 = vadd.f32 0.0, %v150
    %v152 = vpop.f32.mrb[0].mxu0
    %153 = vdwg.mxu0
    %154 = vxpose.xlu0.c.b16.start [1/8] %v71, 128
    %155 = vxpose.xlu0.c.b16.cont [2/8] 0, 128
    %156 = vxpose.xlu0.c.b16.cont [3/8] 0, 128
    %157 = vxpose.xlu0.c.b16.cont [4/8] 0, 128
    %158 = vxpose.xlu0.c.b16.cont [5/8] 0, 128
    %159 = vxpose.xlu0.c.b16.cont [6/8] 0, 128
    %160 = vxpose.xlu0.c.b16.cont [7/8] 0, 128
    %161 = vxpose.xlu0.c.b16.end [8/8] 0, 128
    %v162 = vpop.trf.xlu0
    %v163 = vpop.trf.xlu0
    %v164 = vpop.trf.xlu0
    %v165 = vpop.trf.xlu0
    %v166 = vpop.trf.xlu0
    %v167 = vpop.trf.xlu0
    %v168 = vpop.trf.xlu0
    %v169 = vpop.trf.xlu0
    %v171 = vsel %vm94, %v162, 0
    %v174 = vsel %vm94, %v163, 0
    %v177 = vsel %vm101, %v75, 0
    %179 = vmatprep.subr.bf16.mxu0 0
    %180 = vmatpush1.bf16.msra.mxu0 %v177
    %181 = vmatprep.subr.bf16.mxu0 0
    %182 = vmatpush1.bf16.msra.mxu0 0
    %183 = vmatprep.subr.bf16.mxu0 0
    %184 = vmatpush1.bf16.msra.mxu0 0
    %185 = vmatprep.subr.bf16.mxu0 0
    %186 = vmatpush1.bf16.msra.mxu0 0
    %187 = vmatprep.subr.bf16.mxu0 0
    %188 = vmatpush1.bf16.msra.mxu0 0
    %189 = vmatprep.subr.bf16.mxu0 0
    %190 = vmatpush1.bf16.msra.mxu0 0
    %191 = vmatprep.subr.bf16.mxu0 0
    %192 = vmatpush1.bf16.msra.mxu0 0
    %193 = vmatprep.subr.bf16.mxu0 0
    %194 = vmatpush1.bf16.msra.mxu0 0
    %195 = vmatprep.subr.bf16.mxu0 0
    %196 = vmatpush1.bf16.msra.mxu0 0
    %197 = vmatprep.subr.bf16.mxu0 0
    %198 = vmatpush1.bf16.msra.mxu0 0
    %199 = vmatprep.subr.bf16.mxu0 0
    %200 = vmatpush1.bf16.msra.mxu0 0
    %201 = vmatprep.subr.bf16.mxu0 0
    %202 = vmatpush1.bf16.msra.mxu0 0
    %203 = vmatprep.subr.bf16.mxu0 0
    %204 = vmatpush1.bf16.msra.mxu0 0
    %205 = vmatprep.subr.bf16.mxu0 0
    %206 = vmatpush1.bf16.msra.mxu0 0
    %207 = vmatprep.subr.bf16.mxu0 0
    %208 = vmatpush1.bf16.msra.mxu0 0
    %209 = vmatprep.subr.bf16.mxu0 0
    %210 = vmatpush1.bf16.msra.mxu0 0
    %211 = vmatprep.mubr.bf16.mxu0 0
    %212 = vmatmul.mubr.bf16.gmra.mrb[0].mxu0 %v171
    %v213 = vpop.f32.mrb[0].mxu0
    %v214 = vadd.f32 0.0, %v213
    %v215 = vpop.f32.mrb[0].mxu0
    %v216 = vpop.f32.mrb[0].mxu0
    %v217 = vadd.f32 0.0, %v216
    %v218 = vpop.f32.mrb[0].mxu0
    %219 = vmatprep.mubr.bf16.mxu0 0
    %220 = vmatmul.mubr.bf16.gmra.mrb[0].mxu0 %v174
    %v221 = vpop.f32.mrb[0].mxu0
    %v222 = vadd.f32 0.0, %v221
    %v223 = vpop.f32.mrb[0].mxu0
    %v224 = vpop.f32.mrb[0].mxu0
    %v225 = vadd.f32 0.0, %v224
    %v226 = vpop.f32.mrb[0].mxu0
    %227 = vdwg.mxu0
    %228 = vxpose.xlu0.c.b16.start [1/8] %v72, 128
    %229 = vxpose.xlu0.c.b16.cont [2/8] 0, 128
    %230 = vxpose.xlu0.c.b16.cont [3/8] 0, 128
    %231 = vxpose.xlu0.c.b16.cont [4/8] 0, 128
    %232 = vxpose.xlu0.c.b16.cont [5/8] 0, 128
    %233 = vxpose.xlu0.c.b16.cont [6/8] 0, 128
    %234 = vxpose.xlu0.c.b16.cont [7/8] 0, 128
    %235 = vxpose.xlu0.c.b16.end [8/8] 0, 128
    %v236 = vpop.trf.xlu0
    %v237 = vpop.trf.xlu0
    %v238 = vpop.trf.xlu0
    %v239 = vpop.trf.xlu0
    %v240 = vpop.trf.xlu0
    %v241 = vpop.trf.xlu0
    %v242 = vpop.trf.xlu0
    %v243 = vpop.trf.xlu0
    %v245 = vsel %vm94, %v236, 0
    %v248 = vsel %vm94, %v237, 0
    %v251 = vsel %vm101, %v76, 0
    %253 = vmatprep.subr.bf16.mxu0 0
    %254 = vmatpush1.bf16.msra.mxu0 %v251
    %255 = vmatprep.subr.bf16.mxu0 0
    %256 = vmatpush1.bf16.msra.mxu0 0
    %257 = vmatprep.subr.bf16.mxu0 0
    %258 = vmatpush1.bf16.msra.mxu0 0
    %259 = vmatprep.subr.bf16.mxu0 0
    %260 = vmatpush1.bf16.msra.mxu0 0
    %261 = vmatprep.subr.bf16.mxu0 0
    %262 = vmatpush1.bf16.msra.mxu0 0
    %263 = vmatprep.subr.bf16.mxu0 0
    %264 = vmatpush1.bf16.msra.mxu0 0
    %265 = vmatprep.subr.bf16.mxu0 0
    %266 = vmatpush1.bf16.msra.mxu0 0
    %267 = vmatprep.subr.bf16.mxu0 0
    %268 = vmatpush1.bf16.msra.mxu0 0
    %269 = vmatprep.subr.bf16.mxu0 0
    %270 = vmatpush1.bf16.msra.mxu0 0
    %271 = vmatprep.subr.bf16.mxu0 0
    %272 = vmatpush1.bf16.msra.mxu0 0
    %273 = vmatprep.subr.bf16.mxu0 0
    %274 = vmatpush1.bf16.msra.mxu0 0
    %275 = vmatprep.subr.bf16.mxu0 0
    %276 = vmatpush1.bf16.msra.mxu0 0
    %277 = vmatprep.subr.bf16.mxu0 0
    %278 = vmatpush1.bf16.msra.mxu0 0
    %279 = vmatprep.subr.bf16.mxu0 0
    %280 = vmatpush1.bf16.msra.mxu0 0
    %281 = vmatprep.subr.bf16.mxu0 0
    %282 = vmatpush1.bf16.msra.mxu0 0
    %283 = vmatprep.subr.bf16.mxu0 0
    %284 = vmatpush1.bf16.msra.mxu0 0
    %285 = vmatprep.mubr.bf16.mxu0 0
    %286 = vmatmul.mubr.bf16.gmra.mrb[0].mxu0 %v245
    %v287 = vpop.f32.mrb[0].mxu0
    %v288 = vadd.f32 0.0, %v287
    %v289 = vpop.f32.mrb[0].mxu0
    %v290 = vpop.f32.mrb[0].mxu0
    %v291 = vadd.f32 0.0, %v290
    %v292 = vpop.f32.mrb[0].mxu0
    %293 = vmatprep.mubr.bf16.mxu0 0
    %294 = vmatmul.mubr.bf16.gmra.mrb[0].mxu0 %v248
    %v295 = vpop.f32.mrb[0].mxu0
    %v296 = vadd.f32 0.0, %v295
    %v297 = vpop.f32.mrb[0].mxu0
    %v298 = vpop.f32.mrb[0].mxu0
    %v299 = vadd.f32 0.0, %v298
    %v300 = vpop.f32.mrb[0].mxu0
    %301 = vdwg.mxu0
    %302 = vxpose.xlu0.c.b16.start [1/8] %v73, 128
    %303 = vxpose.xlu0.c.b16.cont [2/8] 0, 128
    %304 = vxpose.xlu0.c.b16.cont [3/8] 0, 128
    %305 = vxpose.xlu0.c.b16.cont [4/8] 0, 128
    %306 = vxpose.xlu0.c.b16.cont [5/8] 0, 128
    %307 = vxpose.xlu0.c.b16.cont [6/8] 0, 128
    %308 = vxpose.xlu0.c.b16.cont [7/8] 0, 128
    %309 = vxpose.xlu0.c.b16.end [8/8] 0, 128
    %v310 = vpop.trf.xlu0
    %v311 = vpop.trf.xlu0
    %v312 = vpop.trf.xlu0
    %v313 = vpop.trf.xlu0
    %v314 = vpop.trf.xlu0
    %v315 = vpop.trf.xlu0
    %v316 = vpop.trf.xlu0
    %v317 = vpop.trf.xlu0
    %v319 = vsel %vm94, %v310, 0
    %v322 = vsel %vm94, %v311, 0
    %v325 = vsel %vm101, %v77, 0
    %327 = vmatprep.subr.bf16.mxu0 0
    %328 = vmatpush1.bf16.msra.mxu0 %v325
    %329 = vmatprep.subr.bf16.mxu0 0
    %330 = vmatpush1.bf16.msra.mxu0 0
    %331 = vmatprep.subr.bf16.mxu0 0
    %332 = vmatpush1.bf16.msra.mxu0 0
    %333 = vmatprep.subr.bf16.mxu0 0
    %334 = vmatpush1.bf16.msra.mxu0 0
    %335 = vmatprep.subr.bf16.mxu0 0
    %336 = vmatpush1.bf16.msra.mxu0 0
    %337 = vmatprep.subr.bf16.mxu0 0
    %338 = vmatpush1.bf16.msra.mxu0 0
    %339 = vmatprep.subr.bf16.mxu0 0
    %340 = vmatpush1.bf16.msra.mxu0 0
    %341 = vmatprep.subr.bf16.mxu0 0
    %342 = vmatpush1.bf16.msra.mxu0 0
    %343 = vmatprep.subr.bf16.mxu0 0
    %344 = vmatpush1.bf16.msra.mxu0 0
    %345 = vmatprep.subr.bf16.mxu0 0
    %346 = vmatpush1.bf16.msra.mxu0 0
    %347 = vmatprep.subr.bf16.mxu0 0
    %348 = vmatpush1.bf16.msra.mxu0 0
    %349 = vmatprep.subr.bf16.mxu0 0
    %350 = vmatpush1.bf16.msra.mxu0 0
    %351 = vmatprep.subr.bf16.mxu0 0
    %352 = vmatpush1.bf16.msra.mxu0 0
    %353 = vmatprep.subr.bf16.mxu0 0
    %354 = vmatpush1.bf16.msra.mxu0 0
    %355 = vmatprep.subr.bf16.mxu0 0
    %356 = vmatpush1.bf16.msra.mxu0 0
    %357 = vmatprep.subr.bf16.mxu0 0
    %358 = vmatpush1.bf16.msra.mxu0 0
    %359 = vmatprep.mubr.bf16.mxu0 0
    %360 = vmatmul.mubr.bf16.gmra.mrb[0].mxu0 %v319
    %v361 = vpop.f32.mrb[0].mxu0
    %v362 = vadd.f32 0.0, %v361
    %v363 = vpop.f32.mrb[0].mxu0
    %v364 = vpop.f32.mrb[0].mxu0
    %v365 = vadd.f32 0.0, %v364
    %v366 = vpop.f32.mrb[0].mxu0
    %367 = vmatprep.mubr.bf16.mxu0 0
    %368 = vmatmul.mubr.bf16.gmra.mrb[0].mxu0 %v322
    %v369 = vpop.f32.mrb[0].mxu0
    %v370 = vadd.f32 0.0, %v369
    %v371 = vpop.f32.mrb[0].mxu0
    %v372 = vpop.f32.mrb[0].mxu0
    %v373 = vadd.f32 0.0, %v372
    %v374 = vpop.f32.mrb[0].mxu0
    %375 = vdwg.mxu0
    %v376 = vmax.f32 %v140, %v143
    %v377 = vmax.f32 %v376, %v148
    %v378 = vmax.f32 %v377, %v151
    %v379 = vrot.slane %v378, 4
    %v380 = vmax.f32 %v378, %v379
    %v381 = vrot.slane %v380, 2
    %v382 = vmax.f32 %v380, %v381
    %v383 = vrot.slane %v382, 1
    %v384 = vmax.f32 %v382, %v383
    %v385 = vmax.f32 %v214, %v217
    %v386 = vmax.f32 %v385, %v222
    %v387 = vmax.f32 %v386, %v225
    %v388 = vrot.slane %v387, 4
    %v389 = vmax.f32 %v387, %v388
    %v390 = vrot.slane %v389, 2
    %v391 = vmax.f32 %v389, %v390
    %v392 = vrot.slane %v391, 1
    %v393 = vmax.f32 %v391, %v392
    %v394 = vmax.f32 %v288, %v291
    %v395 = vmax.f32 %v394, %v296
    %v396 = vmax.f32 %v395, %v299
    %v397 = vrot.slane %v396, 4
    %v398 = vmax.f32 %v396, %v397
    %v399 = vrot.slane %v398, 2
    %v400 = vmax.f32 %v398, %v399
    %v401 = vrot.slane %v400, 1
    %v402 = vmax.f32 %v400, %v401
    %v403 = vmax.f32 %v362, %v365
    %v404 = vmax.f32 %v403, %v370
    %v405 = vmax.f32 %v404, %v373
    %v406 = vrot.slane %v405, 4
    %v407 = vmax.f32 %v405, %v406
    %v408 = vrot.slane %v407, 2
    %v409 = vmax.f32 %v407, %v408
    %v410 = vrot.slane %v409, 1
    %v411 = vmax.f32 %v409, %v410
    %vm416 = vcmask 1041409
    %v417 = vsel %vm416, %v393, %v384
    %vm418 = vcmask 1042434
    %v419 = vsel %vm418, %v402, %v417
    %vm420 = vcmask 1043459
    %v421 = vsel %vm420, %v411, %v419
    %v423 = vsel %vm101, %v421, -inf
    %424 = vmax.xlane.f32.xlu0 %v423
    %v425 = vpop.xlane.xlu0 %424
    %v427 = vrot.slane %v425, 1
    %v428 = vrot.slane %v425, 2
    %v429 = vrot.slane %v425, 3
    %v434 = vsub.f32 %v384, %v425
    %v435 = vsub.f32 %v393, %v427
    %v436 = vsub.f32 %v402, %v428
    %v437 = vsub.f32 %v411, %v429
    %v438 = vmul.f32 %v434, 1.442695
    %v439 = vpow.pop %v438
    %v440 = vmul.f32 %v435, 1.442695
    %v441 = vpow.pop %v440
    %v442 = vmul.f32 %v436, 1.442695
    %v443 = vpow.pop %v442
    %v444 = vmul.f32 %v437, 1.442695
    %v445 = vpow.pop %v444
    %v450 = vrot.slane %v441, 7
    %v451 = vsel %vm416, %v450, %v439
    %v452 = vrot.slane %v443, 6
    %v453 = vsel %vm418, %v452, %v451
    %v454 = vrot.slane %v445, 5
    %v455 = vsel %vm420, %v454, %v453
    %v457 = vsel %vm101, %v455, 0.0
    %458 = vadd.xlane.f32.xlu0 %v457
    %v459 = vpop.xlane.xlu0 %458
    %v460 = vlog2.pop %v459
    %v461 = vmul.f32 %v460, 0.6931472
    %v463 = vrot.slane %v461, 1
    %v464 = vrot.slane %v461, 2
    %v465 = vrot.slane %v461, 3
    %v470 = vsub.f32 %v434, %v461
    %v471 = vsub.f32 %v435, %v463
    %v472 = vsub.f32 %v436, %v464
    %v473 = vsub.f32 %v437, %v465
    %v474 = vld [vmem:[#allocation2] sm:$0x1]
    %v475 = vld [vmem:[#allocation8] sm:$0xf]
    %v476 = vsel %vm101, %v475, -inf
    %477 = vmax.xlane.f32.xlu0 %v476
    %v478 = vpop.xlane.xlu0 %477
    %v479 = vsub.f32 %v475, %v478
    %v480 = vmul.f32 %v479, 1.442695
    %v481 = vpow.pop %v480
    %v482 = vsel %vm101, %v481, 0.0
    %483 = vadd.xlane.f32.xlu0 %v482
    %v484 = vpop.xlane.xlu0 %483
    %v485 = vrcp.pop %v484
    %v486 = vmul.f32 %v481, %v485
    %v488 = vlaneseq
    %v489 = vshrl.u32 %v488, 7
    %v490 = vsub.s32 0, %v489
    %v491 = vrot.slane %v474, %v490
    %v493 = vmul.f32 %v491, %v486
    %v494 = vsel %vm101, %v493, -inf
    %495 = vmax.xlane.f32.xlu0 %v494
    %v496 = vpop.xlane.xlu0 %495
    %v497 = vsub.f32 %v493, %v496
    %v498 = vmul.f32 %v497, 1.442695
    %v499 = vpow.pop %v498
    %v500 = vsel %vm101, %v499, 0.0
    %501 = vadd.xlane.f32.xlu0 %v500
    %v502 = vpop.xlane.xlu0 %501
    %v503 = vlog2.pop %v502
    %v504 = vmul.f32 %v503, 0.6931472
    %v505 = vsub.f32 %v497, %v504
    %v506 = vmul.f32 %v505, 1.442695
    %v507 = vpow.pop %v506
    %v512 = vrot.slane %v471, 7
    %v513 = vsel %vm416, %v512, %v470
    %v514 = vrot.slane %v472, 6
    %v515 = vsel %vm418, %v514, %v513
    %v516 = vrot.slane %v473, 5
    %v517 = vsel %vm420, %v516, %v515
    %v519 = vsub.f32 %v505, %v517
    %v520 = vmul.f32 %v507, %v519
    %v521 = vsel %vm101, %v520, 0.0
    %522 = vadd.xlane.f32.xlu0 %v521
    %v523 = vpop.xlane.xlu0 %522
    %vm524 = vcmask 3072
    %525 = vst.msk [vmem:[#allocation10] sm:$0xf] %vm524, %v523
    // Predicated region
    $region34: #{tpu_custom_call.1} parent=1 // pred_check
      _
    $region35: #{tpu_custom_call.1} parent=1 // pred_check_branch
      %527 = sbr.rel (0) target = $region37
    $region36: #{tpu_custom_call.1} parent=1 // pred_region
      %s529 = ssub.s32 64, 64
      %530 = vsyncadd [#allocation4], %s529
      %s532 = sshll.u32 [#allocation10], 4
      %s533 = int_to_ptr.vmem [resolvable:$true] %s532
      %535 = dma.vmem_to_hbm [thread:$0]  %s533, 64, %s4, [#allocation4]
    $region37: #{tpu_custom_call.1} parent=1 // pred_fallthru
      _
    // Predicated region
    $region38: #{tpu_custom_call.1} parent=1 // pred_check
      _
    $region39: #{tpu_custom_call.1} parent=1 // pred_check_branch
      %537 = sbr.rel (0) target = $region41
    $region40: #{tpu_custom_call.1} parent=1 // pred_region
      %538 = dma.done [#allocation4], 64
    $region41: #{tpu_custom_call.1} parent=1 // pred_fallthru
      _
    %539 = vsyncpa [#allocation3], 1
    %540 = vsyncpa [#allocation6], 1
    %541 = vsyncpa [#allocation9], 1
    %542 = vsyncpa [#allocation4], 1

</llo_original>
